<compile_context>
chip_gen: v7x
topology: tpu7x:2x2x1
jax: 0.10.0
libtpu: 0.0.40
codegen_flags: <defaults>
</compile_context>

<pallas_src>
import jax
import jax.numpy as jnp
from jax.experimental import pallas as pl
from jax.experimental.pallas import tpu as pltpu

EPS = 1e-5   # nn.BatchNorm1d default
LANE = 128   # TPU lane width


def _round_up(n, m):
    return (n + m - 1) // m * m


# --------------------------------------------------------------------------- kernel
def _mlp_kernel(*refs):
    """refs = (x_ref, [w, b] * n_hidden, w_out_row, b_out, o_ref).

    w : BN-folded (in, out) weights (f32 or bf16)
    b : f32 (1, out) folded biases
    w_out_row : final Linear weight as an f32 (1, H_last) row
    """
    x_ref = refs[0]
    o_ref = refs[-1]
    params = refs[1:-1]
    n_hidden = (len(params) - 2) // 2

    h = x_ref[...].astype(jnp.float32)
    for l in range(n_hidden):
        w = params[2 * l][...]
        b = params[2 * l + 1][...]
        # Linear (+ folded BatchNorm): bf16 inputs / f32 accumulation when the
        # weights are bf16; bias add, ReLU stay in f32.
        z = jnp.dot(h.astype(w.dtype), w, preferred_element_type=jnp.float32) + b
        h = jnp.maximum(z, 0.0)          # ReLU; Dropout == identity (eval mode)

    w_out = params[-2][...]              # (1, H_last) f32
    b_out = params[-1][...]              # (1, 1)      f32
    # N=1 output head: VPU multiply + lane reduction instead of a 1-lane MXU matmul.
    out = jnp.sum(h * w_out, axis=-1, keepdims=True) + b_out
    o_ref[...] = out.astype(o_ref.dtype)


# --------------------------------------------------------------------------- wrapper
def fold_params(params, weight_dtype=jnp.bfloat16):
    """Fold eval-mode BatchNorm into the Linear layers and pad hidden widths to
    multiples of 128 lanes.  Returns [W'_1, b'_1, ..., W'_n, b'_n, w_out_row, b_out].
    Zero-padding is exact: padded lanes produce z=0 -> ReLU(0)=0 and contribute
    nothing downstream."""
    n_hidden = (len(params) - 2) // 6
    folded = []
    prev_pad = None  # padded output width of the previous layer
    for l in range(n_hidden):
        w, b, gamma, beta, rm, rv = params[6 * l:6 * l + 6]
        scale = gamma * jax.lax.rsqrt(rv + EPS)          # (1, H)
        w_f = w * scale                                  # (in, H)
        b_f = (b - rm) * scale + beta                    # (1, H)
        in_dim, out_dim = w_f.shape
        out_pad = _round_up(out_dim, LANE)
        if prev_pad is not None and prev_pad != in_dim:
            w_f = jnp.pad(w_f, ((0, prev_pad - in_dim), (0, 0)))
        if out_pad != out_dim:
            w_f = jnp.pad(w_f, ((0, 0), (0, out_pad - out_dim)))
            b_f = jnp.pad(b_f, ((0, 0), (0, out_pad - out_dim)))
        folded += [w_f.astype(weight_dtype), b_f.astype(jnp.float32)]
        prev_pad = out_pad

    w_out, b_out = params[-2:]                           # (H_last, 1), (1, 1)
    w_row = w_out.T                                      # (1, H_last)
    if prev_pad != w_row.shape[1]:
        w_row = jnp.pad(w_row, ((0, 0), (0, prev_pad - w_row.shape[1])))
    folded += [w_row.astype(jnp.float32), b_out.astype(jnp.float32)]
    return folded


def surrogate_forward(x, folded_params, *, batch_tile=256):
    """SurrogateNet forward.  x: (B, input_dim) f32 -> (B, 1) f32."""
    B, D = x.shape
    assert batch_tile % 8 == 0, "batch_tile must be a multiple of the f32 sublane (8)"
    tile = batch_tile if B >= batch_tile else _round_up(max(B, 8), 8)
    Bp = _round_up(B, tile)
    if Bp != B:
        x = jnp.pad(x, ((0, Bp - B), (0, 0)))
    n_tiles = Bp // tile

    in_specs = [pl.BlockSpec((tile, D), lambda i: (i, 0))]
    for p in folded_params:
        # Parameters are small and their block index is constant across the grid,
        # so they stay resident in VMEM (no re-DMA per step).
        in_specs.append(pl.BlockSpec(p.shape, lambda i: (0, 0)))

    out = pl.pallas_call(
        _mlp_kernel,
        out_shape=jax.ShapeDtypeStruct((Bp, 1), jnp.float32),
        grid_spec=pltpu.PrefetchScalarGridSpec(
            num_scalar_prefetch=0,
            grid=(n_tiles,),
            in_specs=in_specs,
            out_specs=pl.BlockSpec((tile, 1), lambda i: (i, 0)),
        ),
        compiler_params=pltpu.CompilerParams(
            dimension_semantics=("parallel",),
        ),
    )(x, *folded_params)
    return out[:B]


# --------------------------------------------------------------------------- params / reference
def init_params(key, input_dim, hidden_dims=(256, 256, 128, 64)):
    """Linear init mimicking nn.Linear default (U[-1/sqrt(fan_in), 1/sqrt(fan_in)]).
    BatchNorm params/stats are randomized (as in a trained model) so that the
    BN folding path is actually exercised."""
    params = []
    prev = input_dim
    for h in hidden_dims:
        key, k1, k2, k3, k4, k5, k6 = jax.random.split(key, 7)
        bound = 1.0 / float(prev) ** 0.5
        w = jax.random.uniform(k1, (prev, h), jnp.float32, -bound, bound)   # (in, out)
        b = jax.random.uniform(k2, (1, h), jnp.float32, -bound, bound)
        gamma = jax.random.uniform(k3, (1, h), jnp.float32, 0.5, 1.5)
        beta = 0.1 * jax.random.normal(k4, (1, h), jnp.float32)
        rmean = 0.1 * jax.random.normal(k5, (1, h), jnp.float32)
        rvar = jax.random.uniform(k6, (1, h), jnp.float32, 0.5, 1.5)
        params += [w, b, gamma, beta, rmean, rvar]
        prev = h
    key, k1, k2 = jax.random.split(key, 3)
    bound = 1.0 / float(prev) ** 0.5
    w_out = jax.random.uniform(k1, (prev, 1), jnp.float32, -bound, bound)
    b_out = jax.random.uniform(k2, (1, 1), jnp.float32, -bound, bound)
    params += [w_out, b_out]
    return params


def reference_forward(x, params):
    """Pure-JAX reference with explicit (unfolded) eval-mode BatchNorm."""
    n_hidden = (len(params) - 2) // 6
    h = x.astype(jnp.float32)
    for l in range(n_hidden):
        w, b, gamma, beta, rm, rv = params[6 * l:6 * l + 6]
        z = h @ w + b
        z = (z - rm) * jax.lax.rsqrt(rv + EPS) * gamma + beta
        h = jnp.maximum(z, 0.0)
    w_out, b_out = params[-2:]
    return h @ w_out + b_out


def reference_forward_folded(x, folded):
    """Pure-JAX reference of exactly the math the kernel implements (folded BN,
    padded widths, same matmul input dtype)."""
    n_hidden = (len(folded) - 2) // 2
    h = x.astype(jnp.float32)
    for l in range(n_hidden):
        w, b = folded[2 * l], folded[2 * l + 1]
        z = jnp.dot(h.astype(w.dtype), w, preferred_element_type=jnp.float32) + b
        h = jnp.maximum(z, 0.0)
    w_out, b_out = folded[-2], folded[-1]
    return jnp.sum(h * w_out, axis=-1, keepdims=True) + b_out


# --------------------------------------------------------------------------- main
if __name__ == "__main__":
    input_dim = 8
    hidden_dims = (256, 256, 128, 64)

    key = jax.random.PRNGKey(0)
    kx1, kx2, kp = jax.random.split(key, 3)
    params = init_params(kp, input_dim, hidden_dims)

    x_small = jax.random.normal(kx1, (16, input_dim), jnp.float32)    # single-tile path
    x_large = jax.random.normal(kx2, (600, input_dim), jnp.float32)   # multi-tile + ragged tail

    ref_small = reference_forward(x_small, params)
    ref_large = reference_forward(x_large, params)

    # --- f32-weight path ------------------------------------------------------
    folded_f32 = fold_params(params, weight_dtype=jnp.float32)
    y_small = jax.block_until_ready(surrogate_forward(x_small, folded_f32))
    y_large = jax.block_until_ready(surrogate_forward(x_large, folded_f32, batch_tile=256))
    assert y_small.shape == (16, 1) and y_large.shape == (600, 1)
    # kernel == the folded math it implements (tight)
    assert jnp.allclose(y_small, reference_forward_folded(x_small, folded_f32),
                        atol=5e-4, rtol=5e-4), "f32 kernel mismatch vs folded reference"
    assert jnp.allclose(y_large, reference_forward_folded(x_large, folded_f32),
                        atol=5e-4, rtol=5e-4), "f32 kernel mismatch vs folded reference"
    # folded math == original module math (loose; covers matmul precision modes)
    assert jnp.allclose(y_small, ref_small, atol=1e-2, rtol=1e-2), "f32 kernel vs module ref"
    assert jnp.allclose(y_large, ref_large, atol=1e-2, rtol=1e-2), "f32 kernel vs module ref"

    # --- bf16-weight fast path (bf16 MXU inputs, f32 accumulation) ------------
    folded_bf16 = fold_params(params, weight_dtype=jnp.bfloat16)
    yb = jax.block_until_ready(surrogate_forward(x_large, folded_bf16, batch_tile=256))
    assert jnp.allclose(yb, reference_forward_folded(x_large, folded_bf16),
                        atol=5e-4, rtol=5e-4), "bf16 kernel mismatch vs folded bf16 reference"
    assert jnp.allclose(yb, ref_large, atol=5e-2, rtol=5e-2), "bf16 kernel drifted from module ref"

    print("KERNEL_OK")
</pallas_src>

<mosaic_0001>
module attributes {stable_mosaic.version = 11 : i64} {
  func.func @_mlp_kernel(%arg0: i32, %arg1: memref<16x8xf32, #tpu.memory_space<vmem>>, %arg2: memref<8x256xf32, #tpu.memory_space<vmem>>, %arg3: memref<1x256xf32, #tpu.memory_space<vmem>>, %arg4: memref<256x256xf32, #tpu.memory_space<vmem>>, %arg5: memref<1x256xf32, #tpu.memory_space<vmem>>, %arg6: memref<256x128xf32, #tpu.memory_space<vmem>>, %arg7: memref<1x128xf32, #tpu.memory_space<vmem>>, %arg8: memref<128x128xf32, #tpu.memory_space<vmem>>, %arg9: memref<1x128xf32, #tpu.memory_space<vmem>>, %arg10: memref<1x128xf32, #tpu.memory_space<vmem>>, %arg11: memref<1x1xf32, #tpu.memory_space<vmem>>, %arg12: memref<16x1xf32, #tpu.memory_space<vmem>>) attributes {dimension_semantics = [#tpu.dimension_semantics<parallel>], iteration_bounds = array<i64: 1>, scalar_prefetch = 0 : i64, scratch_operands = 0 : i64, tpu.core_type = #tpu.core_type<tc>, window_params = [{transform_indices = @transform_0, window_bounds = array<i64: 16, 8>}, {pipeline_mode = #tpu.pipeline_mode<synchronous>, transform_indices = @transform_1, window_bounds = array<i64: 8, 256>}, {pipeline_mode = #tpu.pipeline_mode<synchronous>, transform_indices = @transform_2, window_bounds = array<i64: 1, 256>}, {pipeline_mode = #tpu.pipeline_mode<synchronous>, transform_indices = @transform_3, window_bounds = array<i64: 256, 256>}, {pipeline_mode = #tpu.pipeline_mode<synchronous>, transform_indices = @transform_4, window_bounds = array<i64: 1, 256>}, {pipeline_mode = #tpu.pipeline_mode<synchronous>, transform_indices = @transform_5, window_bounds = array<i64: 256, 128>}, {pipeline_mode = #tpu.pipeline_mode<synchronous>, transform_indices = @transform_6, window_bounds = array<i64: 1, 128>}, {pipeline_mode = #tpu.pipeline_mode<synchronous>, transform_indices = @transform_7, window_bounds = array<i64: 128, 128>}, {pipeline_mode = #tpu.pipeline_mode<synchronous>, transform_indices = @transform_8, window_bounds = array<i64: 1, 128>}, {pipeline_mode = #tpu.pipeline_mode<synchronous>, transform_indices = @transform_9, window_bounds = array<i64: 1, 128>}, {pipeline_mode = #tpu.pipeline_mode<synchronous>, transform_indices = @transform_10, window_bounds = array<i64: 1, 1>}, {transform_indices = @transform_11, window_bounds = array<i64: 16, 1>}]} {
    %c0 = arith.constant 0 : index
    %c0_0 = arith.constant 0 : index
    %0 = vector.load %arg1[%c0, %c0_0] : memref<16x8xf32, #tpu.memory_space<vmem>>, vector<16x8xf32>
    %c0_1 = arith.constant 0 : index
    %c0_2 = arith.constant 0 : index
    %1 = vector.load %arg2[%c0_1, %c0_2] : memref<8x256xf32, #tpu.memory_space<vmem>>, vector<8x256xf32>
    %c0_3 = arith.constant 0 : index
    %c0_4 = arith.constant 0 : index
    %2 = vector.load %arg3[%c0_3, %c0_4] : memref<1x256xf32, #tpu.memory_space<vmem>>, vector<1x256xf32>
    %cst = arith.constant dense<0.000000e+00> : vector<16x256xf32>
    %3 = tpu.matmul %0, %1, %cst {dimension_numbers = #tpu.dot_dimension_numbers<[1], [0], [0], [1], [0, 0, 1, 1], [], []>} : vector<16x8xf32>, vector<8x256xf32>, vector<16x256xf32> -> vector<16x256xf32>
    %4 = vector.broadcast %2 : vector<1x256xf32> to vector<16x256xf32>
    %5 = arith.addf %3, %4 : vector<16x256xf32>
    %cst_5 = arith.constant 0.000000e+00 : f32
    %6 = vector.broadcast %cst_5 : f32 to vector<16x256xf32>
    %7 = arith.maximumf %5, %6 : vector<16x256xf32>
    %c0_6 = arith.constant 0 : index
    %c0_7 = arith.constant 0 : index
    %8 = vector.load %arg4[%c0_6, %c0_7] : memref<256x256xf32, #tpu.memory_space<vmem>>, vector<256x256xf32>
    %c0_8 = arith.constant 0 : index
    %c0_9 = arith.constant 0 : index
    %9 = vector.load %arg5[%c0_8, %c0_9] : memref<1x256xf32, #tpu.memory_space<vmem>>, vector<1x256xf32>
    %cst_10 = arith.constant dense<0.000000e+00> : vector<16x256xf32>
    %10 = tpu.matmul %7, %8, %cst_10 {dimension_numbers = #tpu.dot_dimension_numbers<[1], [0], [0], [1], [0, 0, 1, 1], [], []>} : vector<16x256xf32>, vector<256x256xf32>, vector<16x256xf32> -> vector<16x256xf32>
    %11 = vector.broadcast %9 : vector<1x256xf32> to vector<16x256xf32>
    %12 = arith.addf %10, %11 : vector<16x256xf32>
    %cst_11 = arith.constant 0.000000e+00 : f32
    %13 = vector.broadcast %cst_11 : f32 to vector<16x256xf32>
    %14 = arith.maximumf %12, %13 : vector<16x256xf32>
    %c0_12 = arith.constant 0 : index
    %c0_13 = arith.constant 0 : index
    %15 = vector.load %arg6[%c0_12, %c0_13] : memref<256x128xf32, #tpu.memory_space<vmem>>, vector<256x128xf32>
    %c0_14 = arith.constant 0 : index
    %c0_15 = arith.constant 0 : index
    %16 = vector.load %arg7[%c0_14, %c0_15] : memref<1x128xf32, #tpu.memory_space<vmem>>, vector<1x128xf32>
    %cst_16 = arith.constant dense<0.000000e+00> : vector<16x128xf32>
    %17 = tpu.matmul %14, %15, %cst_16 {dimension_numbers = #tpu.dot_dimension_numbers<[1], [0], [0], [1], [0, 0, 1, 1], [], []>} : vector<16x256xf32>, vector<256x128xf32>, vector<16x128xf32> -> vector<16x128xf32>
    %18 = vector.broadcast %16 : vector<1x128xf32> to vector<16x128xf32>
    %19 = arith.addf %17, %18 : vector<16x128xf32>
    %cst_17 = arith.constant 0.000000e+00 : f32
    %20 = vector.broadcast %cst_17 : f32 to vector<16x128xf32>
    %21 = arith.maximumf %19, %20 : vector<16x128xf32>
    %c0_18 = arith.constant 0 : index
    %c0_19 = arith.constant 0 : index
    %22 = vector.load %arg8[%c0_18, %c0_19] : memref<128x128xf32, #tpu.memory_space<vmem>>, vector<128x128xf32>
    %c0_20 = arith.constant 0 : index
    %c0_21 = arith.constant 0 : index
    %23 = vector.load %arg9[%c0_20, %c0_21] : memref<1x128xf32, #tpu.memory_space<vmem>>, vector<1x128xf32>
    %cst_22 = arith.constant dense<0.000000e+00> : vector<16x128xf32>
    %24 = tpu.matmul %21, %22, %cst_22 {dimension_numbers = #tpu.dot_dimension_numbers<[1], [0], [0], [1], [0, 0, 1, 1], [], []>} : vector<16x128xf32>, vector<128x128xf32>, vector<16x128xf32> -> vector<16x128xf32>
    %25 = vector.broadcast %23 : vector<1x128xf32> to vector<16x128xf32>
    %26 = arith.addf %24, %25 : vector<16x128xf32>
    %cst_23 = arith.constant 0.000000e+00 : f32
    %27 = vector.broadcast %cst_23 : f32 to vector<16x128xf32>
    %28 = arith.maximumf %26, %27 : vector<16x128xf32>
    %c0_24 = arith.constant 0 : index
    %c0_25 = arith.constant 0 : index
    %29 = vector.load %arg10[%c0_24, %c0_25] : memref<1x128xf32, #tpu.memory_space<vmem>>, vector<1x128xf32>
    %c0_26 = arith.constant 0 : index
    %c0_27 = arith.constant 0 : index
    %30 = vector.load %arg11[%c0_26, %c0_27] : memref<1x1xf32, #tpu.memory_space<vmem>>, vector<1x1xf32>
    %31 = vector.broadcast %29 : vector<1x128xf32> to vector<16x128xf32>
    %32 = arith.mulf %28, %31 : vector<16x128xf32>
    %cst_28 = arith.constant dense<0.000000e+00> : vector<16xf32>
    %33 = vector.multi_reduction <add>, %32, %cst_28 [1] : vector<16x128xf32> to vector<16xf32>
    %34 = vector.shape_cast %33 : vector<16xf32> to vector<16x1xf32>
    %35 = vector.broadcast %30 : vector<1x1xf32> to vector<16x1xf32>
    %36 = arith.addf %34, %35 : vector<16x1xf32>
    %c0_29 = arith.constant 0 : index
    %c0_30 = arith.constant 0 : index
    %37 = vector.load %arg12[%c0_29, %c0_30] : memref<16x1xf32, #tpu.memory_space<vmem>>, vector<16x1xf32>
    tpu.vector_store %arg12[%c0_29, %c0_30], %36 {strides = array<i32>} : memref<16x1xf32, #tpu.memory_space<vmem>>, vector<16x1xf32>,
    return
  }
  func.func @transform_0(%arg0: i32) -> (i32, i32) {
    %c0_i32 = arith.constant 0 : i32
    %c0_i32_0 = arith.constant 0 : i32
    return %arg0, %c0_i32 : i32, i32
  }
  func.func @transform_1(%arg0: i32) -> (i32, i32) {
    %c0_i32 = arith.constant 0 : i32
    %c0_i32_0 = arith.constant 0 : i32
    %c0_i32_1 = arith.constant 0 : i32
    return %c0_i32, %c0_i32_0 : i32, i32
  }
  func.func @transform_2(%arg0: i32) -> (i32, i32) {
    %c0_i32 = arith.constant 0 : i32
    %c0_i32_0 = arith.constant 0 : i32
    %c0_i32_1 = arith.constant 0 : i32
    return %c0_i32, %c0_i32_0 : i32, i32
  }
  func.func @transform_3(%arg0: i32) -> (i32, i32) {
    %c0_i32 = arith.constant 0 : i32
    %c0_i32_0 = arith.constant 0 : i32
    %c0_i32_1 = arith.constant 0 : i32
    return %c0_i32, %c0_i32_0 : i32, i32
  }
  func.func @transform_4(%arg0: i32) -> (i32, i32) {
    %c0_i32 = arith.constant 0 : i32
    %c0_i32_0 = arith.constant 0 : i32
    %c0_i32_1 = arith.constant 0 : i32
    return %c0_i32, %c0_i32_0 : i32, i32
  }
  func.func @transform_5(%arg0: i32) -> (i32, i32) {
    %c0_i32 = arith.constant 0 : i32
    %c0_i32_0 = arith.constant 0 : i32
    %c0_i32_1 = arith.constant 0 : i32
    return %c0_i32, %c0_i32_0 : i32, i32
  }
  func.func @transform_6(%arg0: i32) -> (i32, i32) {
    %c0_i32 = arith.constant 0 : i32
    %c0_i32_0 = arith.constant 0 : i32
    %c0_i32_1 = arith.constant 0 : i32
    return %c0_i32, %c0_i32_0 : i32, i32
  }
  func.func @transform_7(%arg0: i32) -> (i32, i32) {
    %c0_i32 = arith.constant 0 : i32
    %c0_i32_0 = arith.constant 0 : i32
    %c0_i32_1 = arith.constant 0 : i32
    return %c0_i32, %c0_i32_0 : i32, i32
  }
  func.func @transform_8(%arg0: i32) -> (i32, i32) {
    %c0_i32 = arith.constant 0 : i32
    %c0_i32_0 = arith.constant 0 : i32
    %c0_i32_1 = arith.constant 0 : i32
    return %c0_i32, %c0_i32_0 : i32, i32
  }
  func.func @transform_9(%arg0: i32) -> (i32, i32) {
    %c0_i32 = arith.constant 0 : i32
    %c0_i32_0 = arith.constant 0 : i32
    %c0_i32_1 = arith.constant 0 : i32
    return %c0_i32, %c0_i32_0 : i32, i32
  }
  func.func @transform_10(%arg0: i32) -> (i32, i32) {
    %c0_i32 = arith.constant 0 : i32
    %c0_i32_0 = arith.constant 0 : i32
    %c0_i32_1 = arith.constant 0 : i32
    return %c0_i32, %c0_i32_0 : i32, i32
  }
  func.func @transform_11(%arg0: i32) -> (i32, i32) {
    %c0_i32 = arith.constant 0 : i32
    %c0_i32_0 = arith.constant 0 : i32
    return %arg0, %c0_i32 : i32, i32
  }
}

</mosaic_0001>

<llo_original>
// kernel: tpu_custom_call.1
$region0: #{tpu_custom_call.1}
  #allocation0 [shape = 'u32[]', space=smem, size = 0x4, offset = 0x4, fixed_abs, tag = 'smem constant byte address 0x4 - core index']
  #allocation1 [shape = 'u32[144,128]{1,0:T(1,128)}', space=vmem, size = 0x12000, scoped, tag = 'internal scratch']
  #allocation2 [shape = 'f32[1,1]{1,0:T(1,128)S(1)}', space=vmem, size = 0x200, scoped, tag = 'scoped memory for tpu_custom_call.1']
  %s0 = inlined_call_operand.vmem [shape: f32[16,8], index: 0, kind: input, shape index: {}]
  %s1 = inlined_call_operand.vmem [shape: f32[8,256], index: 1, kind: input, shape index: {}]
  %s2 = inlined_call_operand.vmem [shape: f32[1,256], index: 2, kind: input, shape index: {}]
  %s3 = inlined_call_operand.hbm [shape: f32[256,256], index: 3, kind: input, shape index: {}]
  %s4 = inlined_call_operand.vmem [shape: f32[1,256], index: 4, kind: input, shape index: {}]
  %s5 = inlined_call_operand.hbm [shape: f32[256,128], index: 5, kind: input, shape index: {}]
  %s6 = inlined_call_operand.vmem [shape: f32[1,128], index: 6, kind: input, shape index: {}]
  %s7 = inlined_call_operand.hbm [shape: f32[128,128], index: 7, kind: input, shape index: {}]
  %s8 = inlined_call_operand.vmem [shape: f32[1,128], index: 8, kind: input, shape index: {}]
  %s9 = inlined_call_operand.vmem [shape: f32[1,128], index: 9, kind: input, shape index: {}]
  %s10 = inlined_call_operand.<no memory space> [shape: f32[1,1], index: 10, kind: input, shape index: {}]
  %s11 = inlined_call_operand.vmem [shape: f32[16,1], index: 11, kind: output, shape index: {}]
  %s12 = sld [smem:[#allocation0]]
  $region66: #{tpu_custom_call.1} parent=0
    _
  %s14 = ssub.s32 1, %s12
  %s15 = scalar_select 0, %s14, %s12
  %v16 = vstv %s10
  %17 = vst [vmem:[#allocation2] sm:$0x1] %v16
  $region1: #{tpu_custom_call.1} parent=0
    #allocation3 [shape = 'u8[262144]{0}', space=vmem, size = 0x40000, scoped, tag = 'input window, operand 3, single buffered']
    #allocation4 [shape = 's32[1]{0}', space=sflag, size = 0x4, scoped, tag = 'scoped memory for tpu_custom_call.1']
    #allocation5 [shape = 'u8[131072]{0}', space=vmem, size = 0x20000, scoped, tag = 'input window, operand 5, single buffered']
    #allocation6 [shape = 's32[1]{0}', space=sflag, size = 0x4, scoped, tag = 'scoped memory for tpu_custom_call.1']
    #allocation7 [shape = 'u8[65536]{0}', space=vmem, size = 0x10000, scoped, tag = 'input window, operand 7, single buffered']
    %18 = vsyncpa [#allocation4], 0
    %19 = vsyncpa [#allocation6], 0
    // Predicated region
    $region2: #{tpu_custom_call.1} parent=1 // pred_check
      _
    $region3: #{tpu_custom_call.1} parent=1 // pred_check_branch
      %21 = sbr.rel (0) target = $region5
    $region4: #{tpu_custom_call.1} parent=1 // pred_region
      _
    $region5: #{tpu_custom_call.1} parent=1 // pred_fallthru
      _
    // Predicated region
    $region6: #{tpu_custom_call.1} parent=1 // pred_check
      _
    $region7: #{tpu_custom_call.1} parent=1 // pred_check_branch
      %23 = sbr.rel (0) target = $region9
    $region8: #{tpu_custom_call.1} parent=1 // pred_region
      _
    $region9: #{tpu_custom_call.1} parent=1 // pred_fallthru
      _
    // Predicated region
    $region10: #{tpu_custom_call.1} parent=1 // pred_check
      _
    $region11: #{tpu_custom_call.1} parent=1 // pred_check_branch
      %25 = sbr.rel (0) target = $region13
    $region12: #{tpu_custom_call.1} parent=1 // pred_region
      _
    $region13: #{tpu_custom_call.1} parent=1 // pred_fallthru
      _
    // Predicated region
    $region14: #{tpu_custom_call.1} parent=1 // pred_check
      _
    $region15: #{tpu_custom_call.1} parent=1 // pred_check_branch
      %27 = sbr.rel (0) target = $region17
    $region16: #{tpu_custom_call.1} parent=1 // pred_region
      %s29 = ssub.s32 8192, 8192
      %30 = vsyncadd [#allocation4], %s29
      %s31 = sshll.u32 [#allocation3], 4
      %s32 = int_to_ptr.vmem [resolvable:$true] %s31
      %37 = dma.hbm_to_vmem [thread:$0]  %s3, 8192, %s32, [#allocation4], 256, 256, 16
    $region17: #{tpu_custom_call.1} parent=1 // pred_fallthru
      _
    // Predicated region
    $region18: #{tpu_custom_call.1} parent=1 // pred_check
      _
    $region19: #{tpu_custom_call.1} parent=1 // pred_check_branch
      %39 = sbr.rel (0) target = $region21
    $region20: #{tpu_custom_call.1} parent=1 // pred_region
      _
    $region21: #{tpu_custom_call.1} parent=1 // pred_fallthru
      _
    // Predicated region
    $region22: #{tpu_custom_call.1} parent=1 // pred_check
      _
    $region23: #{tpu_custom_call.1} parent=1 // pred_check_branch
      %41 = sbr.rel (0) target = $region25
    $region24: #{tpu_custom_call.1} parent=1 // pred_region
      %s43 = ssub.s32 4096, 4096
      %44 = vsyncadd [#allocation6], %s43
      %s45 = sshll.u32 [#allocation5], 4
      %s46 = int_to_ptr.vmem [resolvable:$true] %s45
      %51 = dma.hbm_to_vmem [thread:$0]  %s5, 4096, %s46, [#allocation6], 128, 128, 8
    $region25: #{tpu_custom_call.1} parent=1 // pred_fallthru
      _
    // Predicated region
    $region26: #{tpu_custom_call.1} parent=1 // pred_check
      _
    $region27: #{tpu_custom_call.1} parent=1 // pred_check_branch
      %53 = sbr.rel (0) target = $region29
    $region28: #{tpu_custom_call.1} parent=1 // pred_region
      _
    $region29: #{tpu_custom_call.1} parent=1 // pred_fallthru
      _
    // Predicated region
    $region30: #{tpu_custom_call.1} parent=1 // pred_check
      _
    $region31: #{tpu_custom_call.1} parent=1 // pred_check_branch
      %55 = sbr.rel (0) target = $region33
    $region32: #{tpu_custom_call.1} parent=1 // pred_region
      %s57 = ssub.s32 2048, 2048
      %58 = vsyncadd [#allocation6], %s57
      %s59 = sshll.u32 [#allocation7], 4
      %s60 = int_to_ptr.vmem [resolvable:$true] %s59
      %65 = dma.hbm_to_vmem [thread:$0]  %s7, 2048, %s60, [#allocation6], 128, 128, 8
    $region33: #{tpu_custom_call.1} parent=1 // pred_fallthru
      _
    // Predicated region
    $region34: #{tpu_custom_call.1} parent=1 // pred_check
      _
    $region35: #{tpu_custom_call.1} parent=1 // pred_check_branch
      %67 = sbr.rel (0) target = $region37
    $region36: #{tpu_custom_call.1} parent=1 // pred_region
      _
    $region37: #{tpu_custom_call.1} parent=1 // pred_fallthru
      _
    // Predicated region
    $region38: #{tpu_custom_call.1} parent=1 // pred_check
      _
    $region39: #{tpu_custom_call.1} parent=1 // pred_check_branch
      %69 = sbr.rel (0) target = $region41
    $region40: #{tpu_custom_call.1} parent=1 // pred_region
      _
    $region41: #{tpu_custom_call.1} parent=1 // pred_fallthru
      _
    // Predicated region
    $region42: #{tpu_custom_call.1} parent=1 // pred_check
      _
    $region43: #{tpu_custom_call.1} parent=1 // pred_check_branch
      %71 = sbr.rel (0) target = $region45
    $region44: #{tpu_custom_call.1} parent=1 // pred_region
      _
    $region45: #{tpu_custom_call.1} parent=1 // pred_fallthru
      _
    // Predicated region
    $region46: #{tpu_custom_call.1} parent=1 // pred_check
      _
    $region47: #{tpu_custom_call.1} parent=1 // pred_check_branch
      %73 = sbr.rel (0) target = $region49
    $region48: #{tpu_custom_call.1} parent=1 // pred_region
      %74 = dma.done [#allocation4], 8192
    $region49: #{tpu_custom_call.1} parent=1 // pred_fallthru
      _
    // Predicated region
    $region50: #{tpu_custom_call.1} parent=1 // pred_check
      _
    $region51: #{tpu_custom_call.1} parent=1 // pred_check_branch
      %76 = sbr.rel (0) target = $region53
    $region52: #{tpu_custom_call.1} parent=1 // pred_region
      %77 = dma.done [#allocation6], 4096
    $region53: #{tpu_custom_call.1} parent=1 // pred_fallthru
      _
    // Predicated region
    $region54: #{tpu_custom_call.1} parent=1 // pred_check
      _
    $region55: #{tpu_custom_call.1} parent=1 // pred_check_branch
      %79 = sbr.rel (0) target = $region57
    $region56: #{tpu_custom_call.1} parent=1 // pred_region
      %80 = dma.done [#allocation6], 2048
    $region57: #{tpu_custom_call.1} parent=1 // pred_fallthru
      _
    %v81 = vld [vmem:[%s0] sm:$0xff]
    %v82 = vld [vmem:[%s0 + $0x8] sm:$0xff]
    %v83 = vld [vmem:[%s1] sm:$0xff]
    %v84 = vld [vmem:[%s1 + $0x8] sm:$0xff]
    %v85 = vld [vmem:[%s2] sm:$0x3]
    %v87 = vlaneseq
    %v88 = vshrl.u32 %v87, 7
    %v89 = vsub.s32 0, %v88
    %v90 = vrot.slane %v85, %v89
    %v91 = vlaneseq
    %v92 = vshrl.u32 %v91, 7
    %v93 = vsub.s32 1, %v92
    %v94 = vrot.slane %v85, %v93
    %vm97 = vcmask 64512
    %v99 = vsel %vm97, %v81, 0
    %v102 = vsel %vm97, %v82, 0
    %104 = vmatprep.subr.mxu0 %v84
    %105 = vmatpush1.msra.mxu0 %v83
    %106 = vmatprep.subr.mxu0 0.0
    %107 = vmatpush1.msra.mxu0 0.0
    %108 = vmatprep.subr.mxu0 0.0
    %109 = vmatpush1.msra.mxu0 0.0
    %110 = vmatprep.subr.mxu0 0.0
    %111 = vmatpush1.msra.mxu0 0.0
    %112 = vmatprep.subr.mxu0 0.0
    %113 = vmatpush1.msra.mxu0 0.0
    %114 = vmatprep.subr.mxu0 0.0
    %115 = vmatpush1.msra.mxu0 0.0
    %116 = vmatprep.subr.mxu0 0.0
    %117 = vmatpush1.msra.mxu0 0.0
    %118 = vmatprep.subr.mxu0 0.0
    %119 = vmatpush1.msra.mxu0 0.0
    %120 = vmatprep.subr.mxu0 0.0
    %121 = vmatpush1.msra.mxu0 0.0
    %122 = vmatprep.subr.mxu0 0.0
    %123 = vmatpush1.msra.mxu0 0.0
    %124 = vmatprep.subr.mxu0 0.0
    %125 = vmatpush1.msra.mxu0 0.0
    %126 = vmatprep.subr.mxu0 0.0
    %127 = vmatpush1.msra.mxu0 0.0
    %128 = vmatprep.subr.mxu0 0.0
    %129 = vmatpush1.msra.mxu0 0.0
    %130 = vmatprep.subr.mxu0 0.0
    %131 = vmatpush1.msra.mxu0 0.0
    %132 = vmatprep.subr.mxu0 0.0
    %133 = vmatpush1.msra.mxu0 0.0
    %134 = vmatprep.subr.mxu0 0.0
    %135 = vmatpush1.msra.mxu0 0.0
    %136 = vmatprep.subr.mxu0 0.0
    %137 = vmatpush1.msra.mxu0 0.0
    %138 = vmatprep.subr.mxu0 0.0
    %139 = vmatpush1.msra.mxu0 0.0
    %140 = vmatprep.subr.mxu0 0.0
    %141 = vmatpush1.msra.mxu0 0.0
    %142 = vmatprep.subr.mxu0 0.0
    %143 = vmatpush1.msra.mxu0 0.0
    %144 = vmatprep.subr.mxu0 0.0
    %145 = vmatpush1.msra.mxu0 0.0
    %146 = vmatprep.subr.mxu0 0.0
    %147 = vmatpush1.msra.mxu0 0.0
    %148 = vmatprep.subr.mxu0 0.0
    %149 = vmatpush1.msra.mxu0 0.0
    %150 = vmatprep.subr.mxu0 0.0
    %151 = vmatpush1.msra.mxu0 0.0
    %152 = vmatprep.subr.mxu0 0.0
    %153 = vmatpush1.msra.mxu0 0.0
    %154 = vmatprep.subr.mxu0 0.0
    %155 = vmatpush1.msra.mxu0 0.0
    %156 = vmatprep.subr.mxu0 0.0
    %157 = vmatpush1.msra.mxu0 0.0
    %158 = vmatprep.subr.mxu0 0.0
    %159 = vmatpush1.msra.mxu0 0.0
    %160 = vmatprep.subr.mxu0 0.0
    %161 = vmatpush1.msra.mxu0 0.0
    %162 = vmatprep.subr.mxu0 0.0
    %163 = vmatpush1.msra.mxu0 0.0
    %164 = vmatprep.subr.mxu0 0.0
    %165 = vmatpush1.msra.mxu0 0.0
    %166 = vmatprep.subr.mxu0 0.0
    %167 = vmatpush1.msra.mxu0 0.0
    %168 = vmatprep.mubr.f32.mxu0 0.0
    %169 = vmatmul.mubr.f32.gmra.mrb[0].mxu0 %v99
    %v170 = vpop.f32.mrb[0].mxu0
    %v171 = vadd.f32 %v90, %v170
    %v172 = vpop.f32.mrb[0].mxu0
    %v173 = vadd.f32 %v94, %v172
    %174 = vmatprep.mubr.f32.mxu0 0.0
    %175 = vmatmul.mubr.f32.gmra.mrb[0].mxu0 %v102
    %v176 = vpop.f32.mrb[0].mxu0
    %v177 = vadd.f32 %v90, %v176
    %v178 = vpop.f32.mrb[0].mxu0
    %v179 = vadd.f32 %v94, %v178
    %180 = vdwg.mxu0
    %v181 = vmax.f32 %v171, 0.0
    %v182 = vmax.f32 %v173, 0.0
    %v183 = vmax.f32 %v177, 0.0
    %v184 = vmax.f32 %v179, 0.0
    %v185 = vld [vmem:[#allocation3] sm:$0xff]
    %v186 = vld [vmem:[#allocation3 + $0x8] sm:$0xff]
    %v187 = vld [vmem:[#allocation3 + $0x10] sm:$0xff]
    %v188 = vld [vmem:[#allocation3 + $0x18] sm:$0xff]
    %v189 = vld [vmem:[#allocation3 + $0x20] sm:$0xff]
    %v190 = vld [vmem:[#allocation3 + $0x28] sm:$0xff]
    %v191 = vld [vmem:[#allocation3 + $0x30] sm:$0xff]
    %v192 = vld [vmem:[#allocation3 + $0x38] sm:$0xff]
    %v193 = vld [vmem:[#allocation3 + $0x40] sm:$0xff]
    %v194 = vld [vmem:[#allocation3 + $0x48] sm:$0xff]
    %v195 = vld [vmem:[#allocation3 + $0x50] sm:$0xff]
    %v196 = vld [vmem:[#allocation3 + $0x58] sm:$0xff]
    %v197 = vld [vmem:[#allocation3 + $0x60] sm:$0xff]
    %v198 = vld [vmem:[#allocation3 + $0x68] sm:$0xff]
    %v199 = vld [vmem:[#allocation3 + $0x70] sm:$0xff]
    %v200 = vld [vmem:[#allocation3 + $0x78] sm:$0xff]
    %v201 = vld [vmem:[#allocation3 + $0x80] sm:$0xff]
    %v202 = vld [vmem:[#allocation3 + $0x88] sm:$0xff]
    %v203 = vld [vmem:[#allocation3 + $0x90] sm:$0xff]
    %v204 = vld [vmem:[#allocation3 + $0x98] sm:$0xff]
    %v205 = vld [vmem:[#allocation3 + $0xa0] sm:$0xff]
    %v206 = vld [vmem:[#allocation3 + $0xa8] sm:$0xff]
    %v207 = vld [vmem:[#allocation3 + $0xb0] sm:$0xff]
    %v208 = vld [vmem:[#allocation3 + $0xb8] sm:$0xff]
    %v209 = vld [vmem:[#allocation3 + $0xc0] sm:$0xff]
    %v210 = vld [vmem:[#allocation3 + $0xc8] sm:$0xff]
    %v211 = vld [vmem:[#allocation3 + $0xd0] sm:$0xff]
    %v212 = vld [vmem:[#allocation3 + $0xd8] sm:$0xff]
    %v213 = vld [vmem:[#allocation3 + $0xe0] sm:$0xff]
    %v214 = vld [vmem:[#allocation3 + $0xe8] sm:$0xff]
    %v215 = vld [vmem:[#allocation3 + $0xf0] sm:$0xff]
    %v216 = vld [vmem:[#allocation3 + $0xf8] sm:$0xff]
    %v217 = vld [vmem:[#allocation3 + $0x100] sm:$0xff]
    %v218 = vld [vmem:[#allocation3 + $0x108] sm:$0xff]
    %v219 = vld [vmem:[#allocation3 + $0x110] sm:$0xff]
    %v220 = vld [vmem:[#allocation3 + $0x118] sm:$0xff]
    %v221 = vld [vmem:[#allocation3 + $0x120] sm:$0xff]
    %v222 = vld [vmem:[#allocation3 + $0x128] sm:$0xff]
    %v223 = vld [vmem:[#allocation3 + $0x130] sm:$0xff]
    %v224 = vld [vmem:[#allocation3 + $0x138] sm:$0xff]
    %v225 = vld [vmem:[#allocation3 + $0x140] sm:$0xff]
    %v226 = vld [vmem:[#allocation3 + $0x148] sm:$0xff]
    %v227 = vld [vmem:[#allocation3 + $0x150] sm:$0xff]
    %v228 = vld [vmem:[#allocation3 + $0x158] sm:$0xff]
    %v229 = vld [vmem:[#allocation3 + $0x160] sm:$0xff]
    %v230 = vld [vmem:[#allocation3 + $0x168] sm:$0xff]
    %v231 = vld [vmem:[#allocation3 + $0x170] sm:$0xff]
    %v232 = vld [vmem:[#allocation3 + $0x178] sm:$0xff]
    %v233 = vld [vmem:[#allocation3 + $0x180] sm:$0xff]
    %v234 = vld [vmem:[#allocation3 + $0x188] sm:$0xff]
    %v235 = vld [vmem:[#allocation3 + $0x190] sm:$0xff]
    %v236 = vld [vmem:[#allocation3 + $0x198] sm:$0xff]
    %v237 = vld [vmem:[#allocation3 + $0x1a0] sm:$0xff]
    %v238 = vld [vmem:[#allocation3 + $0x1a8] sm:$0xff]
    %v239 = vld [vmem:[#allocation3 + $0x1b0] sm:$0xff]
    %v240 = vld [vmem:[#allocation3 + $0x1b8] sm:$0xff]
    %v241 = vld [vmem:[#allocation3 + $0x1c0] sm:$0xff]
    %v242 = vld [vmem:[#allocation3 + $0x1c8] sm:$0xff]
    %v243 = vld [vmem:[#allocation3 + $0x1d0] sm:$0xff]
    %v244 = vld [vmem:[#allocation3 + $0x1d8] sm:$0xff]
    %v245 = vld [vmem:[#allocation3 + $0x1e0] sm:$0xff]
    %v246 = vld [vmem:[#allocation3 + $0x1e8] sm:$0xff]
    %v247 = vld [vmem:[#allocation3 + $0x1f0] sm:$0xff]
    %v248 = vld [vmem:[#allocation3 + $0x1f8] sm:$0xff]
    %v249 = vld [vmem:[%s4] sm:$0x3]
    %v251 = vlaneseq
    %v252 = vshrl.u32 %v251, 7
    %v253 = vsub.s32 0, %v252
    %v254 = vrot.slane %v249, %v253
    %v255 = vlaneseq
    %v256 = vshrl.u32 %v255, 7
    %v257 = vsub.s32 1, %v256
    %v258 = vrot.slane %v249, %v257
    %261 = vmatprep.subr.mxu0 %v186
    %262 = vmatpush1.msra.mxu0 %v185
    %263 = vmatprep.subr.mxu0 %v188
    %264 = vmatpush1.msra.mxu0 %v187
    %265 = vmatprep.subr.mxu0 %v190
    %266 = vmatpush1.msra.mxu0 %v189
    %267 = vmatprep.subr.mxu0 %v192
    %268 = vmatpush1.msra.mxu0 %v191
    %269 = vmatprep.subr.mxu0 %v194
    %270 = vmatpush1.msra.mxu0 %v193
    %271 = vmatprep.subr.mxu0 %v196
    %272 = vmatpush1.msra.mxu0 %v195
    %273 = vmatprep.subr.mxu0 %v198
    %274 = vmatpush1.msra.mxu0 %v197
    %275 = vmatprep.subr.mxu0 %v200
    %276 = vmatpush1.msra.mxu0 %v199
    %277 = vmatprep.subr.mxu0 %v202
    %278 = vmatpush1.msra.mxu0 %v201
    %279 = vmatprep.subr.mxu0 %v204
    %280 = vmatpush1.msra.mxu0 %v203
    %281 = vmatprep.subr.mxu0 %v206
    %282 = vmatpush1.msra.mxu0 %v205
    %283 = vmatprep.subr.mxu0 %v208
    %284 = vmatpush1.msra.mxu0 %v207
    %285 = vmatprep.subr.mxu0 %v210
    %286 = vmatpush1.msra.mxu0 %v209
    %287 = vmatprep.subr.mxu0 %v212
    %288 = vmatpush1.msra.mxu0 %v211
    %289 = vmatprep.subr.mxu0 %v214
    %290 = vmatpush1.msra.mxu0 %v213
    %291 = vmatprep.subr.mxu0 %v216
    %292 = vmatpush1.msra.mxu0 %v215
    %293 = vmatprep.subr.mxu0 %v218
    %294 = vmatpush1.msra.mxu0 %v217
    %295 = vmatprep.subr.mxu0 %v220
    %296 = vmatpush1.msra.mxu0 %v219
    %297 = vmatprep.subr.mxu0 %v222
    %298 = vmatpush1.msra.mxu0 %v221
    %299 = vmatprep.subr.mxu0 %v224
    %300 = vmatpush1.msra.mxu0 %v223
    %301 = vmatprep.subr.mxu0 %v226
    %302 = vmatpush1.msra.mxu0 %v225
    %303 = vmatprep.subr.mxu0 %v228
    %304 = vmatpush1.msra.mxu0 %v227
    %305 = vmatprep.subr.mxu0 %v230
    %306 = vmatpush1.msra.mxu0 %v229
    %307 = vmatprep.subr.mxu0 %v232
    %308 = vmatpush1.msra.mxu0 %v231
    %309 = vmatprep.subr.mxu0 %v234
    %310 = vmatpush1.msra.mxu0 %v233
    %311 = vmatprep.subr.mxu0 %v236
    %312 = vmatpush1.msra.mxu0 %v235
    %313 = vmatprep.subr.mxu0 %v238
    %314 = vmatpush1.msra.mxu0 %v237
    %315 = vmatprep.subr.mxu0 %v240
    %316 = vmatpush1.msra.mxu0 %v239
    %317 = vmatprep.subr.mxu0 %v242
    %318 = vmatpush1.msra.mxu0 %v241
    %319 = vmatprep.subr.mxu0 %v244
    %320 = vmatpush1.msra.mxu0 %v243
    %321 = vmatprep.subr.mxu0 %v246
    %322 = vmatpush1.msra.mxu0 %v245
    %323 = vmatprep.subr.mxu0 %v248
    %324 = vmatpush1.msra.mxu0 %v247
    %325 = vmatprep.mubr.f32.mxu0 %v182
    %326 = vmatmul.mubr.f32.gmra.mrb[0].mxu0 %v181
    %v327 = vpop.f32.mrb[0].mxu0
    %v328 = vadd.f32 %v254, %v327
    %v329 = vpop.f32.mrb[0].mxu0
    %v330 = vadd.f32 %v258, %v329
    %331 = vmatprep.mubr.f32.mxu0 %v184
    %332 = vmatmul.mubr.f32.gmra.mrb[0].mxu0 %v183
    %v333 = vpop.f32.mrb[0].mxu0
    %v334 = vadd.f32 %v254, %v333
    %v335 = vpop.f32.mrb[0].mxu0
    %v336 = vadd.f32 %v258, %v335
    %337 = vdwg.mxu0
    %v338 = vmax.f32 %v328, 0.0
    %v339 = vmax.f32 %v330, 0.0
    %v340 = vmax.f32 %v334, 0.0
    %v341 = vmax.f32 %v336, 0.0
    %v342 = vld [vmem:[#allocation5] sm:$0xff]
    %v343 = vld [vmem:[#allocation5 + $0x8] sm:$0xff]
    %v344 = vld [vmem:[#allocation5 + $0x10] sm:$0xff]
    %v345 = vld [vmem:[#allocation5 + $0x18] sm:$0xff]
    %v346 = vld [vmem:[#allocation5 + $0x20] sm:$0xff]
    %v347 = vld [vmem:[#allocation5 + $0x28] sm:$0xff]
    %v348 = vld [vmem:[#allocation5 + $0x30] sm:$0xff]
    %v349 = vld [vmem:[#allocation5 + $0x38] sm:$0xff]
    %v350 = vld [vmem:[#allocation5 + $0x40] sm:$0xff]
    %v351 = vld [vmem:[#allocation5 + $0x48] sm:$0xff]
    %v352 = vld [vmem:[#allocation5 + $0x50] sm:$0xff]
    %v353 = vld [vmem:[#allocation5 + $0x58] sm:$0xff]
    %v354 = vld [vmem:[#allocation5 + $0x60] sm:$0xff]
    %v355 = vld [vmem:[#allocation5 + $0x68] sm:$0xff]
    %v356 = vld [vmem:[#allocation5 + $0x70] sm:$0xff]
    %v357 = vld [vmem:[#allocation5 + $0x78] sm:$0xff]
    %v358 = vld [vmem:[#allocation5 + $0x80] sm:$0xff]
    %v359 = vld [vmem:[#allocation5 + $0x88] sm:$0xff]
    %v360 = vld [vmem:[#allocation5 + $0x90] sm:$0xff]
    %v361 = vld [vmem:[#allocation5 + $0x98] sm:$0xff]
    %v362 = vld [vmem:[#allocation5 + $0xa0] sm:$0xff]
    %v363 = vld [vmem:[#allocation5 + $0xa8] sm:$0xff]
    %v364 = vld [vmem:[#allocation5 + $0xb0] sm:$0xff]
    %v365 = vld [vmem:[#allocation5 + $0xb8] sm:$0xff]
    %v366 = vld [vmem:[#allocation5 + $0xc0] sm:$0xff]
    %v367 = vld [vmem:[#allocation5 + $0xc8] sm:$0xff]
    %v368 = vld [vmem:[#allocation5 + $0xd0] sm:$0xff]
    %v369 = vld [vmem:[#allocation5 + $0xd8] sm:$0xff]
    %v370 = vld [vmem:[#allocation5 + $0xe0] sm:$0xff]
    %v371 = vld [vmem:[#allocation5 + $0xe8] sm:$0xff]
    %v372 = vld [vmem:[#allocation5 + $0xf0] sm:$0xff]
    %v373 = vld [vmem:[#allocation5 + $0xf8] sm:$0xff]
    %v374 = vld [vmem:[%s6] sm:$0x1]
    %v376 = vlaneseq
    %v377 = vshrl.u32 %v376, 7
    %v378 = vsub.s32 0, %v377
    %v379 = vrot.slane %v374, %v378
    %381 = vmatprep.subr.mxu0 0.0
    %382 = vmatpush1.msra.mxu0 %v342
    %383 = vmatprep.subr.mxu0 0.0
    %384 = vmatpush1.msra.mxu0 %v343
    %385 = vmatprep.subr.mxu0 0.0
    %386 = vmatpush1.msra.mxu0 %v344
    %387 = vmatprep.subr.mxu0 0.0
    %388 = vmatpush1.msra.mxu0 %v345
    %389 = vmatprep.subr.mxu0 0.0
    %390 = vmatpush1.msra.mxu0 %v346
    %391 = vmatprep.subr.mxu0 0.0
    %392 = vmatpush1.msra.mxu0 %v347
    %393 = vmatprep.subr.mxu0 0.0
    %394 = vmatpush1.msra.mxu0 %v348
    %395 = vmatprep.subr.mxu0 0.0
    %396 = vmatpush1.msra.mxu0 %v349
    %397 = vmatprep.subr.mxu0 0.0
    %398 = vmatpush1.msra.mxu0 %v350
    %399 = vmatprep.subr.mxu0 0.0
    %400 = vmatpush1.msra.mxu0 %v351
    %401 = vmatprep.subr.mxu0 0.0
    %402 = vmatpush1.msra.mxu0 %v352
    %403 = vmatprep.subr.mxu0 0.0
    %404 = vmatpush1.msra.mxu0 %v353
    %405 = vmatprep.subr.mxu0 0.0
    %406 = vmatpush1.msra.mxu0 %v354
    %407 = vmatprep.subr.mxu0 0.0
    %408 = vmatpush1.msra.mxu0 %v355
    %409 = vmatprep.subr.mxu0 0.0
    %410 = vmatpush1.msra.mxu0 %v356
    %411 = vmatprep.subr.mxu0 0.0
    %412 = vmatpush1.msra.mxu0 %v357
    %413 = vmatprep.subr.mxu0 0.0
    %414 = vmatpush1.msra.mxu0 %v358
    %415 = vmatprep.subr.mxu0 0.0
    %416 = vmatpush1.msra.mxu0 %v359
    %417 = vmatprep.subr.mxu0 0.0
    %418 = vmatpush1.msra.mxu0 %v360
    %419 = vmatprep.subr.mxu0 0.0
    %420 = vmatpush1.msra.mxu0 %v361
    %421 = vmatprep.subr.mxu0 0.0
    %422 = vmatpush1.msra.mxu0 %v362
    %423 = vmatprep.subr.mxu0 0.0
    %424 = vmatpush1.msra.mxu0 %v363
    %425 = vmatprep.subr.mxu0 0.0
    %426 = vmatpush1.msra.mxu0 %v364
    %427 = vmatprep.subr.mxu0 0.0
    %428 = vmatpush1.msra.mxu0 %v365
    %429 = vmatprep.subr.mxu0 0.0
    %430 = vmatpush1.msra.mxu0 %v366
    %431 = vmatprep.subr.mxu0 0.0
    %432 = vmatpush1.msra.mxu0 %v367
    %433 = vmatprep.subr.mxu0 0.0
    %434 = vmatpush1.msra.mxu0 %v368
    %435 = vmatprep.subr.mxu0 0.0
    %436 = vmatpush1.msra.mxu0 %v369
    %437 = vmatprep.subr.mxu0 0.0
    %438 = vmatpush1.msra.mxu0 %v370
    %439 = vmatprep.subr.mxu0 0.0
    %440 = vmatpush1.msra.mxu0 %v371
    %441 = vmatprep.subr.mxu0 0.0
    %442 = vmatpush1.msra.mxu0 %v372
    %443 = vmatprep.subr.mxu0 0.0
    %444 = vmatpush1.msra.mxu0 %v373
    %445 = vmatprep.mubr.f32.mxu0 %v339
    %446 = vmatmul.mubr.f32.gmra.mrb[0].mxu0 %v338
    %v447 = vpop.f32.mrb[0].mxu0
    %v448 = vadd.f32 %v379, %v447
    %v449 = vpop.f32.mrb[0].mxu0
    %450 = vmatprep.mubr.f32.mxu0 %v341
    %451 = vmatmul.mubr.f32.gmra.mrb[0].mxu0 %v340
    %v452 = vpop.f32.mrb[0].mxu0
    %v453 = vadd.f32 %v379, %v452
    %v454 = vpop.f32.mrb[0].mxu0
    %455 = vdwg.mxu0
    %v456 = vmax.f32 %v448, 0.0
    %v457 = vmax.f32 %v453, 0.0
    %v458 = vld [vmem:[#allocation7] sm:$0xff]
    %v459 = vld [vmem:[#allocation7 + $0x8] sm:$0xff]
    %v460 = vld [vmem:[#allocation7 + $0x10] sm:$0xff]
    %v461 = vld [vmem:[#allocation7 + $0x18] sm:$0xff]
    %v462 = vld [vmem:[#allocation7 + $0x20] sm:$0xff]
    %v463 = vld [vmem:[#allocation7 + $0x28] sm:$0xff]
    %v464 = vld [vmem:[#allocation7 + $0x30] sm:$0xff]
    %v465 = vld [vmem:[#allocation7 + $0x38] sm:$0xff]
    %v466 = vld [vmem:[#allocation7 + $0x40] sm:$0xff]
    %v467 = vld [vmem:[#allocation7 + $0x48] sm:$0xff]
    %v468 = vld [vmem:[#allocation7 + $0x50] sm:$0xff]
    %v469 = vld [vmem:[#allocation7 + $0x58] sm:$0xff]
    %v470 = vld [vmem:[#allocation7 + $0x60] sm:$0xff]
    %v471 = vld [vmem:[#allocation7 + $0x68] sm:$0xff]
    %v472 = vld [vmem:[#allocation7 + $0x70] sm:$0xff]
    %v473 = vld [vmem:[#allocation7 + $0x78] sm:$0xff]
    %v474 = vld [vmem:[%s8] sm:$0x1]
    %v476 = vlaneseq
    %v477 = vshrl.u32 %v476, 7
    %v478 = vsub.s32 0, %v477
    %v479 = vrot.slane %v474, %v478
    %481 = vmatprep.subr.mxu0 0.0
    %482 = vmatpush1.msra.mxu0 %v458
    %483 = vmatprep.subr.mxu0 0.0
    %484 = vmatpush1.msra.mxu0 %v459
    %485 = vmatprep.subr.mxu0 0.0
    %486 = vmatpush1.msra.mxu0 %v460
    %487 = vmatprep.subr.mxu0 0.0
    %488 = vmatpush1.msra.mxu0 %v461
    %489 = vmatprep.subr.mxu0 0.0
    %490 = vmatpush1.msra.mxu0 %v462
    %491 = vmatprep.subr.mxu0 0.0
    %492 = vmatpush1.msra.mxu0 %v463
    %493 = vmatprep.subr.mxu0 0.0
    %494 = vmatpush1.msra.mxu0 %v464
    %495 = vmatprep.subr.mxu0 0.0
    %496 = vmatpush1.msra.mxu0 %v465
    %497 = vmatprep.subr.mxu0 0.0
    %498 = vmatpush1.msra.mxu0 %v466
    %499 = vmatprep.subr.mxu0 0.0
    %500 = vmatpush1.msra.mxu0 %v467
    %501 = vmatprep.subr.mxu0 0.0
    %502 = vmatpush1.msra.mxu0 %v468
    %503 = vmatprep.subr.mxu0 0.0
    %504 = vmatpush1.msra.mxu0 %v469
    %505 = vmatprep.subr.mxu0 0.0
    %506 = vmatpush1.msra.mxu0 %v470
    %507 = vmatprep.subr.mxu0 0.0
    %508 = vmatpush1.msra.mxu0 %v471
    %509 = vmatprep.subr.mxu0 0.0
    %510 = vmatpush1.msra.mxu0 %v472
    %511 = vmatprep.subr.mxu0 0.0
    %512 = vmatpush1.msra.mxu0 %v473
    %513 = vmatprep.subr.mxu0 0.0
    %514 = vmatpush1.msra.mxu0 0.0
    %515 = vmatprep.subr.mxu0 0.0
    %516 = vmatpush1.msra.mxu0 0.0
    %517 = vmatprep.subr.mxu0 0.0
    %518 = vmatpush1.msra.mxu0 0.0
    %519 = vmatprep.subr.mxu0 0.0
    %520 = vmatpush1.msra.mxu0 0.0
    %521 = vmatprep.subr.mxu0 0.0
    %522 = vmatpush1.msra.mxu0 0.0
    %523 = vmatprep.subr.mxu0 0.0
    %524 = vmatpush1.msra.mxu0 0.0
    %525 = vmatprep.subr.mxu0 0.0
    %526 = vmatpush1.msra.mxu0 0.0
    %527 = vmatprep.subr.mxu0 0.0
    %528 = vmatpush1.msra.mxu0 0.0
    %529 = vmatprep.subr.mxu0 0.0
    %530 = vmatpush1.msra.mxu0 0.0
    %531 = vmatprep.subr.mxu0 0.0
    %532 = vmatpush1.msra.mxu0 0.0
    %533 = vmatprep.subr.mxu0 0.0
    %534 = vmatpush1.msra.mxu0 0.0
    %535 = vmatprep.subr.mxu0 0.0
    %536 = vmatpush1.msra.mxu0 0.0
    %537 = vmatprep.subr.mxu0 0.0
    %538 = vmatpush1.msra.mxu0 0.0
    %539 = vmatprep.subr.mxu0 0.0
    %540 = vmatpush1.msra.mxu0 0.0
    %541 = vmatprep.subr.mxu0 0.0
    %542 = vmatpush1.msra.mxu0 0.0
    %543 = vmatprep.subr.mxu0 0.0
    %544 = vmatpush1.msra.mxu0 0.0
    %545 = vmatprep.mubr.f32.mxu0 0.0
    %546 = vmatmul.mubr.f32.gmra.mrb[0].mxu0 %v456
    %v547 = vpop.f32.mrb[0].mxu0
    %v548 = vadd.f32 %v479, %v547
    %v549 = vpop.f32.mrb[0].mxu0
    %550 = vmatprep.mubr.f32.mxu0 0.0
    %551 = vmatmul.mubr.f32.gmra.mrb[0].mxu0 %v457
    %v552 = vpop.f32.mrb[0].mxu0
    %v553 = vadd.f32 %v479, %v552
    %v554 = vpop.f32.mrb[0].mxu0
    %555 = vdwg.mxu0
    %v556 = vmax.f32 %v548, 0.0
    %v557 = vmax.f32 %v553, 0.0
    %v558 = vld [vmem:[%s9] sm:$0x1]
    %v559 = vld [vmem:[#allocation2] sm:$0x1]
    %v561 = vlaneseq
    %v562 = vshrl.u32 %v561, 7
    %v563 = vsub.s32 0, %v562
    %v564 = vrot.slane %v558, %v563
    %v566 = vmul.f32 %v556, %v564
    %v567 = vmul.f32 %v557, %v564
    %568 = vadd.xlane.f32.xlu0 %v566
    %v569 = vpop.xlane.xlu0 %568
    %570 = vadd.xlane.f32.xlu0 %v567
    %v571 = vpop.xlane.xlu0 %570
    %v573 = vlaneseq
    %v574 = vshrl.u32 %v573, 7
    %v575 = vsub.s32 0, %v574
    %v576 = vrot.slane %v559, %v575
    %v578 = vadd.f32 %v569, %v576
    %v579 = vadd.f32 %v571, %v576
    %vm580 = vcmask 7168
    %581 = vst.msk [vmem:[%s11] sm:$0xff] %vm580, %v578
    %582 = vst.msk [vmem:[%s11 + $0x8] sm:$0xff] %vm580, %v579
    // Predicated region
    $region58: #{tpu_custom_call.1} parent=1 // pred_check
      _
    $region59: #{tpu_custom_call.1} parent=1 // pred_check_branch
      %584 = sbr.rel (0) target = $region61
    $region60: #{tpu_custom_call.1} parent=1 // pred_region
      _
    $region61: #{tpu_custom_call.1} parent=1 // pred_fallthru
      _
    // Predicated region
    $region62: #{tpu_custom_call.1} parent=1 // pred_check
      _
    $region63: #{tpu_custom_call.1} parent=1 // pred_check_branch
      %586 = sbr.rel (0) target = $region65
    $region64: #{tpu_custom_call.1} parent=1 // pred_region
      _
    $region65: #{tpu_custom_call.1} parent=1 // pred_fallthru
      _
    %587 = vsyncpa [#allocation4], 1
    %588 = vsyncpa [#allocation6], 1

</llo_original>
